<compile_context>
chip_gen: v7x
topology: tpu7x:2x2x1
jax: 0.10.0
libtpu: 0.0.40
codegen_flags: <defaults>
</compile_context>

<pallas_src>
import functools

import jax
import jax.numpy as jnp
from jax.experimental import pallas as pl
from jax.experimental.pallas import tpu as pltpu


def _round_up(x, m):
    return ((x + m - 1) // m) * m


def _causal_conv1d_kernel(x_ref, prev_ref, w_ref, b_ref, o_ref, stacked_ref, *,
                          kernel_size, stride, dilation, c_in_pad, halo_w, tile_m):
    """Grid = (batch, L-tile); both axes are parallel (no cross-step state).

    x_ref       : (1, stride*C_in_pad, tile_m)  current input tile (phase-major rows)
    prev_ref    : (1, stride*C_in_pad, halo_w)  last halo_w columns of the previous tile
    w_ref       : (C_out_pad, K*C_in_pad)       taps folded into one matmul weight
    b_ref       : (C_out_pad, 1)                bias
    o_ref       : (1, C_out_pad, tile_m)        output tile (lane-dense, mult. of 128)
    stacked_ref : (K*C_in_pad, tile_m)          VMEM scratch: stacked tap matrix
    """
    pad_left = dilation * (kernel_size - 1)
    li = pl.program_id(1)
    # Halo columns are causally zero on the first L tile of every batch row.
    pmask = (li > 0).astype(stacked_ref.dtype)

    for t in range(kernel_size):                     # static Python loop over taps
        off = t * dilation - pad_left                # <= 0, in original sample units
        p = off % stride                             # phase this tap reads from
        gap = (p - off) // stride                    # columns supplied by the halo
        src = slice(p * c_in_pad, (p + 1) * c_in_pad)
        dst = slice(t * c_in_pad, (t + 1) * c_in_pad)
        if gap > 0:
            stacked_ref[dst, :gap] = prev_ref[0, src, halo_w - gap:] * pmask
        if gap < tile_m:
            stacked_ref[dst, gap:] = x_ref[0, src, :tile_m - gap]

    acc = jnp.dot(w_ref[...], stacked_ref[...], preferred_element_type=jnp.float32)
    o_ref[0] = (acc + b_ref[...]).astype(o_ref.dtype)


def lazy_causal_conv1d(x, weight, bias, *, stride=1, dilation=1, tile_l_out=None):
    """x: (N, C_in, L), weight: (C_out, C_in, K), bias: (C_out,)."""
    n, c_in, length = x.shape
    c_out, _, k = weight.shape
    pad_left = dilation * (k - 1)
    l_out = (length - 1) // stride + 1               # causal conv output length

    itemsize = jnp.dtype(x.dtype).itemsize
    sub = 8 * max(1, 4 // itemsize)                  # dtype-aware sublane granularity
    c_in_pad = _round_up(c_in, sub)
    c_out_pad = _round_up(c_out, sub)
    c_rows = stride * c_in_pad                       # rows of phase-deinterleaved input

    pad_left_m = -(-pad_left // stride)              # halo depth in de-interleaved cols
    halo_w = _round_up(max(pad_left_m, 1), 128)

    # ---- VMEM-aware lane tile (per-generation limits) -------------------------
    try:
        vmem_cap = int(pltpu.get_tpu_info().vmem_capacity_bytes)
    except Exception:                                # query unavailable: assume v7x
        vmem_cap = 64 * 1024 * 1024
    vmem_limit = min(vmem_cap * 3 // 4, 96 * 1024 * 1024)
    # bytes per lane column: double-buffered in/out blocks + stacked scratch +
    # live in-kernel temporaries (f32 acc + one tap slice)
    per_col = (itemsize * (2 * c_rows + 2 * c_out_pad + k * c_in_pad + 2 * c_in_pad)
               + 4 * c_out_pad)
    const = (itemsize * (2 * c_rows * halo_w + 2 * c_out_pad * k * c_in_pad)
             + (2 << 20))                            # slack for compiler temporaries
    tile_cap = max(((vmem_limit - const) // per_col) // 128 * 128, 128)
    if tile_l_out is None:
        tile_m = min(2048, _round_up(l_out, 128), tile_cap)
    else:
        tile_m = min(_round_up(tile_l_out, 128), tile_cap)
    tile_m = _round_up(max(tile_m, 128), halo_w)     # halo block must tile tile_m

    num_tiles = -(-l_out // tile_m)
    l_out_pad = num_tiles * tile_m
    halo_ratio = tile_m // halo_w

    # ---- one HBM prep pass: channel pad + right pad (+ stride de-interleave) --
    # The causal LEFT padding is never materialized in HBM: the kernel's halo
    # input window supplies it, masked to zero on the first tile of each row.
    if stride == 1:
        if c_in_pad != c_in or l_out_pad != length:
            x = jnp.pad(x, ((0, 0), (0, c_in_pad - c_in), (0, l_out_pad - length)))
        xd = x
    else:
        x = jnp.pad(x, ((0, 0), (0, c_in_pad - c_in),
                        (0, l_out_pad * stride - length)))
        xd = (x.reshape(n, c_in_pad, l_out_pad, stride)
               .transpose(0, 3, 1, 2)                # (N, stride, C_in_pad, M): phase-major
               .reshape(n, c_rows, l_out_pad))

    # Fold the K taps into a single (C_out_pad, K*C_in_pad) matmul weight,
    # rows matching the in-kernel tap stacking order (tap-major, channel-minor).
    w = weight
    if c_out_pad != c_out or c_in_pad != c_in:
        w = jnp.pad(w, ((0, c_out_pad - c_out), (0, c_in_pad - c_in), (0, 0)))
    w2 = jnp.transpose(w, (0, 2, 1)).reshape(c_out_pad, k * c_in_pad)
    b2 = (jnp.pad(bias, ((0, c_out_pad - c_out),)) if c_out_pad != c_out
          else bias).reshape(c_out_pad, 1)

    kernel = functools.partial(
        _causal_conv1d_kernel,
        kernel_size=k, stride=stride, dilation=dilation,
        c_in_pad=c_in_pad, halo_w=halo_w, tile_m=tile_m)

    out = pl.pallas_call(
        kernel,
        out_shape=jax.ShapeDtypeStruct((n, c_out_pad, l_out_pad), x.dtype),
        grid_spec=pltpu.PrefetchScalarGridSpec(
            num_scalar_prefetch=0,
            grid=(n, num_tiles),
            in_specs=[
                # current input tile
                pl.BlockSpec((1, c_rows, tile_m), lambda b_, l_: (b_, 0, l_)),
                # halo: last halo_w columns of the previous tile of the same row
                pl.BlockSpec((1, c_rows, halo_w),
                             lambda b_, l_: (b_, 0, jnp.maximum(l_ * halo_ratio - 1, 0))),
                # constants (index map is constant across the grid)
                # TODO(synk): single-buffer these via pipeline_mode=pl.Buffered(1)
                # once that kwarg is verified on the deployed jax version.
                pl.BlockSpec((c_out_pad, k * c_in_pad), lambda b_, l_: (0, 0)),
                pl.BlockSpec((c_out_pad, 1), lambda b_, l_: (0, 0)),
            ],
            out_specs=pl.BlockSpec((1, c_out_pad, tile_m),
                                   lambda b_, l_: (b_, 0, l_)),
            scratch_shapes=[pltpu.VMEM((k * c_in_pad, tile_m), x.dtype)],
        ),
        compiler_params=pltpu.CompilerParams(
            # No cross-iteration state: batch AND L tiles are independent, so both
            # axes can be sharded across TensorCores (v7x has 2 TCs).
            dimension_semantics=("parallel", "parallel"),
            vmem_limit_bytes=vmem_limit,
        ),
    )(xd, xd, w2, b2)

    # TODO(synk): for very skinny channels / short L, additionally block the batch
    # axis and widen the matmul RHS to (K*C_in_pad, B_tile*tile_m) per grid step.
    if c_out_pad != c_out or l_out_pad != l_out:
        out = out[:, :c_out, :l_out]                 # skipped when already aligned
    return out


def _reference(x, weight, bias, stride, dilation):
    k = weight.shape[-1]
    return jax.lax.conv_general_dilated(
        x, weight,
        window_strides=(stride,),
        padding=[(dilation * (k - 1), 0)],
        rhs_dilation=(dilation,),
        dimension_numbers=("NCH", "OIH", "NCH"),
        precision=jax.lax.Precision.HIGHEST,
    ) + bias[None, :, None]


if __name__ == "__main__":
    key = jax.random.PRNGKey(0)

    def run_case(n, c_in, l, c_out, k, stride, dilation, key, tile=None):
        kx, kw, kb, key = jax.random.split(key, 4)
        x = jax.random.normal(kx, (n, c_in, l), dtype=jnp.float32)
        bound = (1.0 / (c_in * k)) ** 0.5
        w = jax.random.uniform(kw, (c_out, c_in, k), jnp.float32, -bound, bound)
        b = jax.random.uniform(kb, (c_out,), jnp.float32, -bound, bound)
        out = lazy_causal_conv1d(x, w, b, stride=stride, dilation=dilation,
                                 tile_l_out=tile)
        out = jax.block_until_ready(out)
        ref = _reference(x, w, b, stride, dilation)
        assert out.shape == ref.shape, (out.shape, ref.shape)
        assert jnp.allclose(out, ref, rtol=1e-5, atol=1e-5), \
            float(jnp.max(jnp.abs(out - ref)))
        return key

    # 1) primary small config (matches the module demo)
    key = run_case(2, 4, 16, 8, 3, 1, 1, key)
    # 2) multi-tile halo, dilation > 1, odd channel counts (forces padding)
    key = run_case(2, 5, 300, 6, 3, 1, 2, key, tile=128)
    # 3) stride > 1: wrapper de-interleaves L into stride phases
    key = run_case(2, 3, 37, 5, 4, 3, 2, key)

    print("KERNEL_OK")
</pallas_src>

<mosaic_0001>
module attributes {stable_mosaic.version = 11 : i64} {
  func.func @_causal_conv1d_kernel(%arg0: i32, %arg1: i32, %arg2: memref<1x8x128xf32, #tpu.memory_space<vmem>>, %arg3: memref<1x8x128xf32, #tpu.memory_space<vmem>>, %arg4: memref<8x24xf32, #tpu.memory_space<vmem>>, %arg5: memref<8x1xf32, #tpu.memory_space<vmem>>, %arg6: memref<1x8x128xf32, #tpu.memory_space<vmem>>, %arg7: memref<24x128xf32, #tpu.memory_space<vmem>>) attributes {dimension_semantics = [#tpu.dimension_semantics<parallel>, #tpu.dimension_semantics<parallel>], iteration_bounds = array<i64: 2, 1>, scalar_prefetch = 0 : i64, scratch_operands = 1 : i64, tpu.core_type = #tpu.core_type<tc>, window_params = [{transform_indices = @transform_0, window_bounds = array<i64: 1, 8, 128>}, {transform_indices = @transform_1, window_bounds = array<i64: 1, 8, 128>}, {pipeline_mode = #tpu.pipeline_mode<synchronous>, transform_indices = @transform_2, window_bounds = array<i64: 8, 24>}, {pipeline_mode = #tpu.pipeline_mode<synchronous>, transform_indices = @transform_3, window_bounds = array<i64: 8, 1>}, {transform_indices = @transform_4, window_bounds = array<i64: 1, 8, 128>}]} {
    %c0_i32 = arith.constant 0 : i32
    %0 = arith.cmpi sgt, %arg1, %c0_i32 : i32
    %1 = arith.extui %0 : i1 to i32
    %2 = arith.sitofp %1 : i32 to f32
    %c0 = arith.constant 0 : index
    %c0_0 = arith.constant 0 : index
    %c126 = arith.constant 126 : index
    %3 = vector.load %arg3[%c0, %c0_0, %c126] : memref<1x8x128xf32, #tpu.memory_space<vmem>>, vector<1x8x2xf32>
    %4 = vector.shape_cast %3 : vector<1x8x2xf32> to vector<8x2xf32>
    %5 = vector.broadcast %2 : f32 to vector<8x2xf32>
    %6 = arith.mulf %4, %5 : vector<8x2xf32>
    %c0_1 = arith.constant 0 : index
    %c0_2 = arith.constant 0 : index
    %7 = vector.load %arg7[%c0_1, %c0_2] : memref<24x128xf32, #tpu.memory_space<vmem>>, vector<8x2xf32>
    tpu.vector_store %arg7[%c0_1, %c0_2], %6 {strides = array<i32>} : memref<24x128xf32, #tpu.memory_space<vmem>>, vector<8x2xf32>,
    %c0_3 = arith.constant 0 : index
    %c0_4 = arith.constant 0 : index
    %c0_5 = arith.constant 0 : index
    %8 = vector.load %arg2[%c0_3, %c0_4, %c0_5] : memref<1x8x128xf32, #tpu.memory_space<vmem>>, vector<1x8x126xf32>
    %9 = vector.shape_cast %8 : vector<1x8x126xf32> to vector<8x126xf32>
    %c0_6 = arith.constant 0 : index
    %c2 = arith.constant 2 : index
    %10 = vector.load %arg7[%c0_6, %c2] : memref<24x128xf32, #tpu.memory_space<vmem>>, vector<8x126xf32>
    tpu.vector_store %arg7[%c0_6, %c2], %9 {strides = array<i32>} : memref<24x128xf32, #tpu.memory_space<vmem>>, vector<8x126xf32>,
    %c0_7 = arith.constant 0 : index
    %c0_8 = arith.constant 0 : index
    %c127 = arith.constant 127 : index
    %11 = vector.load %arg3[%c0_7, %c0_8, %c127] : memref<1x8x128xf32, #tpu.memory_space<vmem>>, vector<1x8x1xf32>
    %12 = vector.shape_cast %11 : vector<1x8x1xf32> to vector<8x1xf32>
    %13 = vector.broadcast %2 : f32 to vector<8x1xf32>
    %14 = arith.mulf %12, %13 : vector<8x1xf32>
    %c8 = arith.constant 8 : index
    %c0_9 = arith.constant 0 : index
    %15 = vector.load %arg7[%c8, %c0_9] : memref<24x128xf32, #tpu.memory_space<vmem>>, vector<8x1xf32>
    tpu.vector_store %arg7[%c8, %c0_9], %14 {strides = array<i32>} : memref<24x128xf32, #tpu.memory_space<vmem>>, vector<8x1xf32>,
    %c0_10 = arith.constant 0 : index
    %c0_11 = arith.constant 0 : index
    %c0_12 = arith.constant 0 : index
    %16 = vector.load %arg2[%c0_10, %c0_11, %c0_12] : memref<1x8x128xf32, #tpu.memory_space<vmem>>, vector<1x8x127xf32>
    %17 = vector.shape_cast %16 : vector<1x8x127xf32> to vector<8x127xf32>
    %c8_13 = arith.constant 8 : index
    %c1 = arith.constant 1 : index
    %18 = vector.load %arg7[%c8_13, %c1] : memref<24x128xf32, #tpu.memory_space<vmem>>, vector<8x127xf32>
    tpu.vector_store %arg7[%c8_13, %c1], %17 {strides = array<i32>} : memref<24x128xf32, #tpu.memory_space<vmem>>, vector<8x127xf32>,
    %c0_14 = arith.constant 0 : index
    %c0_15 = arith.constant 0 : index
    %c0_16 = arith.constant 0 : index
    %19 = vector.load %arg2[%c0_14, %c0_15, %c0_16] : memref<1x8x128xf32, #tpu.memory_space<vmem>>, vector<1x8x128xf32>
    %20 = vector.shape_cast %19 : vector<1x8x128xf32> to vector<8x128xf32>
    %c16 = arith.constant 16 : index
    %c0_17 = arith.constant 0 : index
    %21 = vector.load %arg7[%c16, %c0_17] : memref<24x128xf32, #tpu.memory_space<vmem>>, vector<8x128xf32>
    tpu.vector_store %arg7[%c16, %c0_17], %20 {strides = array<i32>} : memref<24x128xf32, #tpu.memory_space<vmem>>, vector<8x128xf32>,
    %c0_18 = arith.constant 0 : index
    %c0_19 = arith.constant 0 : index
    %22 = vector.load %arg4[%c0_18, %c0_19] : memref<8x24xf32, #tpu.memory_space<vmem>>, vector<8x24xf32>
    %c0_20 = arith.constant 0 : index
    %c0_21 = arith.constant 0 : index
    %23 = vector.load %arg7[%c0_20, %c0_21] : memref<24x128xf32, #tpu.memory_space<vmem>>, vector<24x128xf32>
    %cst = arith.constant dense<0.000000e+00> : vector<8x128xf32>
    %24 = tpu.matmul %22, %23, %cst {dimension_numbers = #tpu.dot_dimension_numbers<[1], [0], [0], [1], [0, 0, 1, 1], [], []>} : vector<8x24xf32>, vector<24x128xf32>, vector<8x128xf32> -> vector<8x128xf32>
    %c0_22 = arith.constant 0 : index
    %c0_23 = arith.constant 0 : index
    %25 = vector.load %arg5[%c0_22, %c0_23] : memref<8x1xf32, #tpu.memory_space<vmem>>, vector<8x1xf32>
    %26 = vector.broadcast %25 : vector<8x1xf32> to vector<8x128xf32>
    %27 = arith.addf %24, %26 : vector<8x128xf32>
    %c0_24 = arith.constant 0 : index
    %c0_25 = arith.constant 0 : index
    %c0_26 = arith.constant 0 : index
    %28 = vector.load %arg6[%c0_24, %c0_25, %c0_26] : memref<1x8x128xf32, #tpu.memory_space<vmem>>, vector<1x8x128xf32>
    %29 = vector.shape_cast %28 : vector<1x8x128xf32> to vector<8x128xf32>
    %30 = vector.shape_cast %27 : vector<8x128xf32> to vector<1x8x128xf32>
    tpu.vector_store %arg6[%c0_24, %c0_25, %c0_26], %30 {strides = array<i32>} : memref<1x8x128xf32, #tpu.memory_space<vmem>>, vector<1x8x128xf32>,
    return
  }
  func.func @transform_0(%arg0: i32, %arg1: i32) -> (i32, i32, i32) {
    %c0_i32 = arith.constant 0 : i32
    %c0_i32_0 = arith.constant 0 : i32
    return %arg0, %c0_i32, %arg1 : i32, i32, i32
  }
  func.func @transform_1(%arg0: i32, %arg1: i32) -> (i32, i32, i32) {
    %c1_i32 = arith.constant 1 : i32
    %0 = arith.muli %arg1, %c1_i32 : i32
    %c1_i32_0 = arith.constant 1 : i32
    %1 = arith.subi %0, %c1_i32_0 : i32
    %c0_i32 = arith.constant 0 : i32
    %2 = arith.maxsi %1, %c0_i32 : i32
    %c0_i32_1 = arith.constant 0 : i32
    %c0_i32_2 = arith.constant 0 : i32
    return %arg0, %c0_i32_1, %2 : i32, i32, i32
  }
  func.func @transform_2(%arg0: i32, %arg1: i32) -> (i32, i32) {
    %c0_i32 = arith.constant 0 : i32
    %c0_i32_0 = arith.constant 0 : i32
    %c0_i32_1 = arith.constant 0 : i32
    return %c0_i32, %c0_i32_0 : i32, i32
  }
  func.func @transform_3(%arg0: i32, %arg1: i32) -> (i32, i32) {
    %c0_i32 = arith.constant 0 : i32
    %c0_i32_0 = arith.constant 0 : i32
    %c0_i32_1 = arith.constant 0 : i32
    return %c0_i32, %c0_i32_0 : i32, i32
  }
  func.func @transform_4(%arg0: i32, %arg1: i32) -> (i32, i32, i32) {
    %c0_i32 = arith.constant 0 : i32
    %c0_i32_0 = arith.constant 0 : i32
    return %arg0, %c0_i32, %arg1 : i32, i32, i32
  }
}

</mosaic_0001>

<llo_original>
// kernel: tpu_custom_call.1
$region0: #{tpu_custom_call.1}
  #allocation0 [shape = 'u32[]', space=smem, size = 0x4, offset = 0x4, fixed_abs, tag = 'smem constant byte address 0x4 - core index']
  #allocation1 [shape = 'u32[144,128]{1,0:T(1,128)}', space=vmem, size = 0x12000, scoped, tag = 'internal scratch']
  #allocation2 [shape = 'f32[24,128]{1,0:T(8,128)}', space=vmem, size = 0x3000, scoped, tag = 'scratch operand']
  %s0 = inlined_call_operand.hbm [shape: f32[2,8,128], index: 0, kind: input, shape index: {}]
  %s1 = inlined_call_operand.hbm [shape: f32[2,8,128], index: 1, kind: input, shape index: {}]
  %s2 = inlined_call_operand.vmem [shape: f32[8,24], index: 2, kind: input, shape index: {}]
  %s3 = inlined_call_operand.vmem [shape: f32[8,1], index: 3, kind: input, shape index: {}]
  %s4 = inlined_call_operand.hbm [shape: f32[2,8,128], index: 4, kind: output, shape index: {}]
  %s5 = sld [smem:[#allocation0]]
  $region57: #{tpu_custom_call.1} parent=0
    _
  %s7 = ssub.s32 1, %s5
  %s8 = scalar_select 0, %s7, %s5
  $region1: #{tpu_custom_call.1} parent=0
    #allocation3 [shape = 'u8[8192]{0}', space=vmem, size = 0x2000, scoped, tag = 'input window, operand 0']
    #allocation4 [shape = 's32[2]{0}', space=sflag, size = 0x8, scoped, tag = 'scoped memory for tpu_custom_call.1']
    #allocation5 [shape = 's32[2]{0}', space=sflag, size = 0x8, scoped, tag = 'scoped memory for tpu_custom_call.1']
    #allocation6 [shape = 'u8[8192]{0}', space=vmem, size = 0x2000, scoped, tag = 'input window, operand 1']
    #allocation7 [shape = 's32[2]{0}', space=sflag, size = 0x8, scoped, tag = 'scoped memory for tpu_custom_call.1']
    #allocation8 [shape = 'u8[8192]{0}', space=vmem, size = 0x2000, scoped, tag = 'output window, operand 0']
    %9 = vsyncpa [#allocation4], 0
    %s10 = scalar_lea.sflag [#allocation4], 1
    %11 = vsyncpa %s10, 0
    %12 = vsyncpa [#allocation7], 0
    %s13 = scalar_lea.sflag [#allocation7], 1
    %14 = vsyncpa %s13, 0
    %15 = vsyncpa [#allocation5], 0
    %s16 = scalar_lea.sflag [#allocation5], 1
    %17 = vsyncpa %s16, 0
    loop: start=0, step=1, limit=4
    $region2: #{tpu_custom_call.1} parent=1 // loop_pre_header
      _
    $region3: #{tpu_custom_call.1} parent=1 // loop_header
      %s19 = sphi 0, %s23
      %p20 = scmp.ge.s32.totalorder %s19, 4
      %s26 = sphi 0, %s38
      %s27 = sphi 0, %s34
      %s28 = sphi 0, %s26
      %s29 = sphi 0, %s27
      %s30 = sphi 0, %s28
      %s31 = sphi 0, %s29
      %s43 = sphi 0, %s45
      %s46 = sphi 0, %s43
      %s47 = sphi 0, %s46
      %s63 = sphi 0, %s47
      %s77 = sphi 0, %s79
      %s80 = sphi 0, %s77
      %s81 = sphi 0, %s80
      %s97 = sphi 0, %s81
      %s101 = sphi 0, %s101
      %s103 = sphi 0, %s101
      %s104 = sphi 0, %s103
      %s118 = sphi 0, %s104
      %s122 = sphi 0, %s122
      %s124 = sphi 0, %s122
      %s125 = sphi 0, %s124
      %s139 = sphi 0, %s125
      %s147 = sphi 0, %s149
      %s150 = sphi 0, %s147
      %s151 = sphi 0, %s150
      %s167 = sphi 0, %s151
    $region4: #{tpu_custom_call.1} parent=1 // loop_header_branch
      %22 = sbr.rel (%p20) target = $region8
    $region5: #{tpu_custom_call.1} parent=1 // loop_body
      %s24 = ssub.s32 %s19, 1
      %s25 = ssub.s32 %s19, 2
      %s32 = sadd.s32 1, %s27
      %p33 = scmp.ge.s32.totalorder %s32, 1
      %s34 = scalar_select %p33, 0, %s32
      %s35 = sadd.s32 1, %s26
      %s36 = scalar_select %p33, %s35, %s26
      %p37 = scmp.ge.s32.totalorder %s36, 2
      %s38 = scalar_select %p37, 0, %s36
      %s39 = ssub.s32 %s26, %s38
      %s40 = ssub.s32 %s27, %s34
      %s41 = sor.u32 %s39, %s40
      %p42 = scmp.eq.s32.totalorder %s41, 0
      %s44 = sadd.s32 %s43, 1
      %s45 = scalar_select %p42, %s43, %s44
      %p48 = pneg %p42
      %p49 = scmp.eq.s32.totalorder %s19, 1
      %p50 = por %p48, %p49
      %p51 = scmp.ne.s32.totalorder %s43, %s46
      %p52 = scmp.eq.s32.totalorder %s19, 0
      %p53 = por %p51, %p52
      %p54 = scmp.ne.s32.totalorder %s43, %s46
      %p55 = scmp.eq.s32.totalorder %s24, 1
      %p56 = por %p54, %p55
      %p57 = scmp.ne.s32.totalorder %s46, %s47
      %p58 = scmp.eq.s32.totalorder %s24, 0
      %p59 = por %p57, %p58
      %p60 = scmp.ne.s32.totalorder %s46, %s47
      %p61 = scmp.eq.s32.totalorder %s25, 1
      %p62 = por %p60, %p61
      %p64 = scmp.ne.s32.totalorder %s47, %s63
      %p65 = scmp.eq.s32.totalorder %s25, 0
      %p66 = por %p64, %p65
      %s67 = ssub.s32 %s27, 1
      %p68 = scmp.gt.s32.totalorder %s67, 0
      %s69 = scalar_select %p68, %s67, 0
      %s70 = ssub.s32 %s34, 1
      %p71 = scmp.gt.s32.totalorder %s70, 0
      %s72 = scalar_select %p71, %s70, 0
      %s73 = ssub.s32 %s26, %s38
      %s74 = ssub.s32 %s69, %s72
      %s75 = sor.u32 %s73, %s74
      %p76 = scmp.eq.s32.totalorder %s75, 0
      %s78 = sadd.s32 %s77, 1
      %s79 = scalar_select %p76, %s77, %s78
      %p82 = pneg %p76
      %p83 = scmp.eq.s32.totalorder %s19, 1
      %p84 = por %p82, %p83
      %p85 = scmp.ne.s32.totalorder %s77, %s80
      %p86 = scmp.eq.s32.totalorder %s19, 0
      %p87 = por %p85, %p86
      %p88 = scmp.ne.s32.totalorder %s77, %s80
      %p89 = scmp.eq.s32.totalorder %s24, 1
      %p90 = por %p88, %p89
      %p91 = scmp.ne.s32.totalorder %s80, %s81
      %p92 = scmp.eq.s32.totalorder %s24, 0
      %p93 = por %p91, %p92
      %p94 = scmp.ne.s32.totalorder %s80, %s81
      %p95 = scmp.eq.s32.totalorder %s25, 1
      %p96 = por %p94, %p95
      %p98 = scmp.ne.s32.totalorder %s81, %s97
      %p99 = scmp.eq.s32.totalorder %s25, 0
      %p100 = por %p98, %p99
      %s102 = sadd.s32 %s101, 1
      %p105 = scmp.eq.s32.totalorder %s19, 1
      %p106 = scmp.ne.s32.totalorder %s101, %s103
      %p107 = scmp.eq.s32.totalorder %s19, 0
      %p108 = por %p106, %p107
      %p109 = scmp.ne.s32.totalorder %s101, %s103
      %p110 = scmp.eq.s32.totalorder %s24, 1
      %p111 = por %p109, %p110
      %p112 = scmp.ne.s32.totalorder %s103, %s104
      %p113 = scmp.eq.s32.totalorder %s24, 0
      %p114 = por %p112, %p113
      %p115 = scmp.ne.s32.totalorder %s103, %s104
      %p116 = scmp.eq.s32.totalorder %s25, 1
      %p117 = por %p115, %p116
      %p119 = scmp.ne.s32.totalorder %s104, %s118
      %p120 = scmp.eq.s32.totalorder %s25, 0
      %p121 = por %p119, %p120
      %s123 = sadd.s32 %s122, 1
      %p126 = scmp.eq.s32.totalorder %s19, 1
      %p127 = scmp.ne.s32.totalorder %s122, %s124
      %p128 = scmp.eq.s32.totalorder %s19, 0
      %p129 = por %p127, %p128
      %p130 = scmp.ne.s32.totalorder %s122, %s124
      %p131 = scmp.eq.s32.totalorder %s24, 1
      %p132 = por %p130, %p131
      %p133 = scmp.ne.s32.totalorder %s124, %s125
      %p134 = scmp.eq.s32.totalorder %s24, 0
      %p135 = por %p133, %p134
      %p136 = scmp.ne.s32.totalorder %s124, %s125
      %p137 = scmp.eq.s32.totalorder %s25, 1
      %p138 = por %p136, %p137
      %p140 = scmp.ne.s32.totalorder %s125, %s139
      %p141 = scmp.eq.s32.totalorder %s25, 0
      %p142 = por %p140, %p141
      %s143 = ssub.s32 %s26, %s38
      %s144 = ssub.s32 %s27, %s34
      %s145 = sor.u32 %s143, %s144
      %p146 = scmp.eq.s32.totalorder %s145, 0
      %s148 = sadd.s32 %s147, 1
      %s149 = scalar_select %p146, %s147, %s148
      %p152 = pneg %p146
      %p153 = scmp.eq.s32.totalorder %s19, 1
      %p154 = por %p152, %p153
      %p155 = scmp.ne.s32.totalorder %s147, %s150
      %p156 = scmp.eq.s32.totalorder %s19, 0
      %p157 = por %p155, %p156
      %p158 = scmp.ne.s32.totalorder %s147, %s150
      %p159 = scmp.eq.s32.totalorder %s24, 1
      %p160 = por %p158, %p159
      %p161 = scmp.ne.s32.totalorder %s150, %s151
      %p162 = scmp.eq.s32.totalorder %s24, 0
      %p163 = por %p161, %p162
      %p164 = scmp.ne.s32.totalorder %s150, %s151
      %p165 = scmp.eq.s32.totalorder %s25, 1
      %p166 = por %p164, %p165
      %p168 = scmp.ne.s32.totalorder %s151, %s167
      %p169 = scmp.eq.s32.totalorder %s25, 0
      %p170 = por %p168, %p169
      %p171 = scmp.le.s32.totalorder 1, %s19
      %p172 = scmp.lt.s32.totalorder %s19, 3
      %p173 = pnand %p171, %p172
      %p174 = pneg %p173
      // Predicated region
      $region9: #{tpu_custom_call.1} parent=5 // pred_check
        _
      $region10: #{tpu_custom_call.1} parent=5 // pred_check_branch
        %176 = sbr.rel (%p173) target = $region12
      $region11: #{tpu_custom_call.1} parent=5 // pred_region
        %s177 = ssub.s32 %s19, 1
        // Predicated region
        $region13: #{tpu_custom_call.1} parent=11 // pred_check
          %p178 = pneg %p114
        $region14: #{tpu_custom_call.1} parent=11 // pred_check_branch
          %180 = sbr.rel (%p178) target = $region16
        $region15: #{tpu_custom_call.1} parent=11 // pred_region
          _
        $region16: #{tpu_custom_call.1} parent=11 // pred_fallthru
          _
        // Predicated region
        $region17: #{tpu_custom_call.1} parent=11 // pred_check
          %p181 = pneg %p135
        $region18: #{tpu_custom_call.1} parent=11 // pred_check_branch
          %183 = sbr.rel (%p181) target = $region20
        $region19: #{tpu_custom_call.1} parent=11 // pred_region
          _
        $region20: #{tpu_custom_call.1} parent=11 // pred_fallthru
          _
      $region12: #{tpu_custom_call.1} parent=5 // pred_fallthru
        _
      %p184 = scmp.lt.s32.totalorder %s19, 2
      // Predicated region
      $region21: #{tpu_custom_call.1} parent=5 // pred_check
        %p185 = pneg %p184
      $region22: #{tpu_custom_call.1} parent=5 // pred_check_branch
        %187 = sbr.rel (%p185) target = $region24
      $region23: #{tpu_custom_call.1} parent=5 // pred_region
        // Predicated region
        $region25: #{tpu_custom_call.1} parent=23 // pred_check
          %p188 = pneg %p53
        $region26: #{tpu_custom_call.1} parent=23 // pred_check_branch
          %190 = sbr.rel (%p188) target = $region28
        $region27: #{tpu_custom_call.1} parent=23 // pred_region
          %s191 = sand.u32 %s43, 1
          %s192 = scalar_lea.sflag [#allocation4], %s191
          %s193 = sand.u32 %s43, 1
          %s194 = smul.addr %s193, 8
          %s195 = scalar_lea.vmem [#allocation3], %s194
          %s197 = ssub.s32 128, 128
          %198 = vsyncadd %s192, %s197
          %s199 = sadd.s32 %s27, %s26
          %s200 = smul.addr %s199, 128
          %s201 = scalar_lea.hbm %s0, %s200
          %s203 = sshll.u32 %s195, 4
          %s204 = int_to_ptr.vmem [resolvable:$true] %s203
          %206 = dma.hbm_to_vmem [thread:$0]  %s201, 128, %s204, %s192
        $region28: #{tpu_custom_call.1} parent=23 // pred_fallthru
          _
        // Predicated region
        $region29: #{tpu_custom_call.1} parent=23 // pred_check
          %p207 = pneg %p87
        $region30: #{tpu_custom_call.1} parent=23 // pred_check_branch
          %209 = sbr.rel (%p207) target = $region32
        $region31: #{tpu_custom_call.1} parent=23 // pred_region
          %s210 = sand.u32 %s77, 1
          %s211 = scalar_lea.sflag [#allocation7], %s210
          %s212 = sand.u32 %s77, 1
          %s213 = smul.addr %s212, 8
          %s214 = scalar_lea.vmem [#allocation6], %s213
          %s215 = ssub.s32 %s27, 1
          %p216 = scmp.gt.s32.totalorder %s215, 0
          %s217 = scalar_select %p216, %s215, 0
          %s219 = ssub.s32 128, 128
          %220 = vsyncadd %s211, %s219
          %s221 = sadd.s32 %s217, %s26
          %s222 = smul.addr %s221, 128
          %s223 = scalar_lea.hbm %s1, %s222
          %s225 = sshll.u32 %s214, 4
          %s226 = int_to_ptr.vmem [resolvable:$true] %s225
          %228 = dma.hbm_to_vmem [thread:$0]  %s223, 128, %s226, %s211
        $region32: #{tpu_custom_call.1} parent=23 // pred_fallthru
          _
      $region24: #{tpu_custom_call.1} parent=5 // pred_fallthru
        _
      %p229 = scmp.le.s32.totalorder 1, %s19
      %p230 = scmp.lt.s32.totalorder %s19, 3
      %p231 = pnand %p229, %p230
      %p232 = pneg %p231
      // Predicated region
      $region33: #{tpu_custom_call.1} parent=5 // pred_check
        _
      $region34: #{tpu_custom_call.1} parent=5 // pred_check_branch
        %234 = sbr.rel (%p231) target = $region36
      $region35: #{tpu_custom_call.1} parent=5 // pred_region
        %s235 = ssub.s32 %s19, 1
        %s236 = sand.u32 %s46, 1
        %s237 = scalar_lea.sflag [#allocation4], %s236
        %s238 = sand.u32 %s46, 1
        %s239 = smul.addr %s238, 8
        %s240 = scalar_lea.vmem [#allocation3], %s239
        // Predicated region
        $region37: #{tpu_custom_call.1} parent=35 // pred_check
          %p241 = pneg %p59
        $region38: #{tpu_custom_call.1} parent=35 // pred_check_branch
          %243 = sbr.rel (%p241) target = $region40
        $region39: #{tpu_custom_call.1} parent=35 // pred_region
          %244 = dma.done %s237, 128
        $region40: #{tpu_custom_call.1} parent=35 // pred_fallthru
          _
        %s245 = sand.u32 %s80, 1
        %s246 = scalar_lea.sflag [#allocation7], %s245
        %s247 = sand.u32 %s80, 1
        %s248 = smul.addr %s247, 8
        %s249 = scalar_lea.vmem [#allocation6], %s248
        // Predicated region
        $region41: #{tpu_custom_call.1} parent=35 // pred_check
          %p250 = pneg %p93
        $region42: #{tpu_custom_call.1} parent=35 // pred_check_branch
          %252 = sbr.rel (%p250) target = $region44
        $region43: #{tpu_custom_call.1} parent=35 // pred_region
          %253 = dma.done %s246, 128
        $region44: #{tpu_custom_call.1} parent=35 // pred_fallthru
          _
        %s254 = sand.u32 %s46, 1
        %s255 = scalar_lea.sflag [#allocation4], %s254
        %s256 = sand.u32 %s46, 1
        %s257 = smul.addr %s256, 8
        %s258 = scalar_lea.vmem [#allocation3], %s257
        %p259 = pneg %p59
        %p260 = pneg %p56
        %s261 = sand.u32 %s80, 1
        %s262 = scalar_lea.sflag [#allocation7], %s261
        %s263 = sand.u32 %s80, 1
        %s264 = smul.addr %s263, 8
        %s265 = scalar_lea.vmem [#allocation6], %s264
        %p266 = pneg %p93
        %p267 = pneg %p90
        %p268 = pneg %p114
        %p269 = pneg %p111
        %p270 = pneg %p135
        %p271 = pneg %p132
        %p272 = pneg %p163
        %p273 = pneg %p160
        %s274 = sand.u32 %s150, 1
        %s275 = scalar_lea.sflag [#allocation5], %s274
        %s276 = sand.u32 %s150, 1
        %s277 = smul.addr %s276, 8
        %s278 = scalar_lea.vmem [#allocation8], %s277
        %s279 = ssub.s32 %s29, 1
        %p280 = scmp.gt.s32.totalorder %s279, 0
        %s281 = scalar_select %p280, %s279, 0
        %p282 = scmp.gt.s32.totalorder %s29, 0
        %s283 = scalar_select %p282, 1, 0
        %s284 = scvt.s32.f32 %s283
        %v285 = vld [vmem:[%s249] sm:$0xff]
        %v286 = vstv %s284
        %v287 = vmul.f32 %v285, %v286
        %289 = vrot.lane.b32.xlu0 %v287, 2
        %v290 = vpop.permute.xlu0 %289
        %vm292 = vcmask 15360
        %293 = vst.msk [vmem:[#allocation2] sm:$0xff] %vm292, %v290
        %v294 = vld [vmem:[%s240] sm:$0xff]
        %296 = vrot.lane.b32.xlu0 %v294, 2
        %v297 = vpop.permute.xlu0 %296
        %vm299 = vcmask 1047568
        %300 = vst.msk [vmem:[#allocation2] sm:$0xff] %vm299, %v297
        %v301 = vld [vmem:[%s249] sm:$0xff]
        %v302 = vmul.f32 %v301, %v286
        %304 = vrot.lane.b32.xlu0 %v302, 1
        %v305 = vpop.permute.xlu0 %304
        %vm307 = vcmask 7168
        %308 = vst.msk [vmem:[#allocation2 + $0x8] sm:$0xff] %vm307, %v305
        %v309 = vld [vmem:[%s240] sm:$0xff]
        %311 = vrot.lane.b32.xlu0 %v309, 1
        %v312 = vpop.permute.xlu0 %311
        %vm314 = vcmask 1047560
        %315 = vst.msk [vmem:[#allocation2 + $0x8] sm:$0xff] %vm314, %v312
        %v316 = vld [vmem:[%s240] sm:$0xff]
        %317 = vst [vmem:[#allocation2 + $0x10] sm:$0xff] %v316
        %v318 = vld [vmem:[%s2] sm:$0xff]
        %v319 = vld [vmem:[#allocation2] sm:$0xff]
        %v320 = vld [vmem:[#allocation2 + $0x8] sm:$0xff]
        %v321 = vld [vmem:[#allocation2 + $0x10] sm:$0xff]
        %v322 = vld [vmem:[%s3] sm:$0xff]
        %324 = vset.pattern.permute.xlu0 0
        %325 = vperm.xlu0 %324, %v322
        %v326 = vpop.permute.xlu0 %325
        %vm328 = vcmask 195584
        %v330 = vsel %vm328, %v318, 0
        %332 = vmatprep.subr.mxu0 0.0
        %333 = vmatpush1.msra.mxu0 %v319
        %334 = vmatprep.subr.mxu0 0.0
        %335 = vmatpush1.msra.mxu0 %v320
        %336 = vmatprep.subr.mxu0 0.0
        %337 = vmatpush1.msra.mxu0 %v321
        %338 = vmatprep.subr.mxu0 0.0
        %339 = vmatpush1.msra.mxu0 0.0
        %340 = vmatprep.subr.mxu0 0.0
        %341 = vmatpush1.msra.mxu0 0.0
        %342 = vmatprep.subr.mxu0 0.0
        %343 = vmatpush1.msra.mxu0 0.0
        %344 = vmatprep.subr.mxu0 0.0
        %345 = vmatpush1.msra.mxu0 0.0
        %346 = vmatprep.subr.mxu0 0.0
        %347 = vmatpush1.msra.mxu0 0.0
        %348 = vmatprep.subr.mxu0 0.0
        %349 = vmatpush1.msra.mxu0 0.0
        %350 = vmatprep.subr.mxu0 0.0
        %351 = vmatpush1.msra.mxu0 0.0
        %352 = vmatprep.subr.mxu0 0.0
        %353 = vmatpush1.msra.mxu0 0.0
        %354 = vmatprep.subr.mxu0 0.0
        %355 = vmatpush1.msra.mxu0 0.0
        %356 = vmatprep.subr.mxu0 0.0
        %357 = vmatpush1.msra.mxu0 0.0
        %358 = vmatprep.subr.mxu0 0.0
        %359 = vmatpush1.msra.mxu0 0.0
        %360 = vmatprep.subr.mxu0 0.0
        %361 = vmatpush1.msra.mxu0 0.0
        %362 = vmatprep.subr.mxu0 0.0
        %363 = vmatpush1.msra.mxu0 0.0
        %364 = vmatprep.subr.mxu0 0.0
        %365 = vmatpush1.msra.mxu0 0.0
        %366 = vmatprep.subr.mxu0 0.0
        %367 = vmatpush1.msra.mxu0 0.0
        %368 = vmatprep.subr.mxu0 0.0
        %369 = vmatpush1.msra.mxu0 0.0
        %370 = vmatprep.subr.mxu0 0.0
        %371 = vmatpush1.msra.mxu0 0.0
        %372 = vmatprep.subr.mxu0 0.0
        %373 = vmatpush1.msra.mxu0 0.0
        %374 = vmatprep.subr.mxu0 0.0
        %375 = vmatpush1.msra.mxu0 0.0
        %376 = vmatprep.subr.mxu0 0.0
        %377 = vmatpush1.msra.mxu0 0.0
        %378 = vmatprep.subr.mxu0 0.0
        %379 = vmatpush1.msra.mxu0 0.0
        %380 = vmatprep.subr.mxu0 0.0
        %381 = vmatpush1.msra.mxu0 0.0
        %382 = vmatprep.subr.mxu0 0.0
        %383 = vmatpush1.msra.mxu0 0.0
        %384 = vmatprep.subr.mxu0 0.0
        %385 = vmatpush1.msra.mxu0 0.0
        %386 = vmatprep.subr.mxu0 0.0
        %387 = vmatpush1.msra.mxu0 0.0
        %388 = vmatprep.subr.mxu0 0.0
        %389 = vmatpush1.msra.mxu0 0.0
        %390 = vmatprep.subr.mxu0 0.0
        %391 = vmatpush1.msra.mxu0 0.0
        %392 = vmatprep.subr.mxu0 0.0
        %393 = vmatpush1.msra.mxu0 0.0
        %394 = vmatprep.subr.mxu0 0.0
        %395 = vmatpush1.msra.mxu0 0.0
        %396 = vmatprep.mubr.f32.mxu0 0.0
        %397 = vmatmul.mubr.f32.gmra.mrb[0].mxu0 %v330
        %v398 = vpop.f32.mrb[0].mxu0
        %v399 = vadd.f32 %v326, %v398
        %v400 = vpop.f32.mrb[0].mxu0
        %401 = vdwg.mxu0
        %402 = vst [vmem:[%s278] sm:$0xff] %v399
        %s403 = sand.u32 %s150, 1
        %s404 = scalar_lea.sflag [#allocation5], %s403
        %s405 = sand.u32 %s150, 1
        %s406 = smul.addr %s405, 8
        %s407 = scalar_lea.vmem [#allocation8], %s406
        // Predicated region
        $region45: #{tpu_custom_call.1} parent=35 // pred_check
          %p408 = pneg %p160
        $region46: #{tpu_custom_call.1} parent=35 // pred_check_branch
          %410 = sbr.rel (%p408) target = $region48
        $region47: #{tpu_custom_call.1} parent=35 // pred_region
          %s412 = ssub.s32 128, 128
          %413 = vsyncadd %s404, %s412
          %s414 = sadd.s32 %s29, %s28
          %s415 = smul.addr %s414, 128
          %s416 = scalar_lea.hbm %s4, %s415
          %s418 = sshll.u32 %s407, 4
          %s419 = int_to_ptr.vmem [resolvable:$true] %s418
          %421 = dma.vmem_to_hbm [thread:$0]  %s419, 128, %s416, %s404
        $region48: #{tpu_custom_call.1} parent=35 // pred_fallthru
          _
      $region36: #{tpu_custom_call.1} parent=5 // pred_fallthru
        _
      %p422 = scmp.le.s32.totalorder 2, %s19
      // Predicated region
      $region49: #{tpu_custom_call.1} parent=5 // pred_check
        %p423 = pneg %p422
      $region50: #{tpu_custom_call.1} parent=5 // pred_check_branch
        %425 = sbr.rel (%p423) target = $region52
      $region51: #{tpu_custom_call.1} parent=5 // pred_region
        %s426 = ssub.s32 %s19, 2
        // Predicated region
        $region53: #{tpu_custom_call.1} parent=51 // pred_check
          %p427 = pneg %p166
        $region54: #{tpu_custom_call.1} parent=51 // pred_check_branch
          %429 = sbr.rel (%p427) target = $region56
        $region55: #{tpu_custom_call.1} parent=51 // pred_region
          %s430 = sand.u32 %s151, 1
          %s431 = scalar_lea.sflag [#allocation5], %s430
          %s432 = sand.u32 %s151, 1
          %s433 = smul.addr %s432, 8
          %s434 = scalar_lea.vmem [#allocation8], %s433
          %435 = dma.done %s431, 128
        $region56: #{tpu_custom_call.1} parent=51 // pred_fallthru
          _
      $region52: #{tpu_custom_call.1} parent=5 // pred_fallthru
        _
    $region6: #{tpu_custom_call.1} parent=1 // loop_footer
      %s23 = sadd.s32 1, %s19
    $region7: #{tpu_custom_call.1} parent=1 // loop_footer_branch
      %18 = sbr.rel target = $region3
    $region8: #{tpu_custom_call.1} parent=1 // loop_exit
      _
    %436 = vsyncpa [#allocation4], 1
    %s437 = scalar_lea.sflag [#allocation4], 1
    %438 = vsyncpa %s437, 1
    %439 = vsyncpa [#allocation7], 1
    %s440 = scalar_lea.sflag [#allocation7], 1
    %441 = vsyncpa %s440, 1
    %442 = vsyncpa [#allocation5], 1
    %s443 = scalar_lea.sflag [#allocation5], 1
    %444 = vsyncpa %s443, 1

</llo_original>
